<compile_context>
chip_gen: v6e
topology: v6e:2x2x1
jax: 0.10.0
libtpu: 0.0.40
codegen_flags: <defaults>
</compile_context>

<pallas_src>
import jax
import jax.numpy as jnp
from jax.experimental import pallas as pl
from jax.experimental.pallas import tpu as pltpu

HIDDEN = 128
LATENT = 2

_MIN_BB = 16                        # sublane multiple safe for both f32 and bf16 tiles
_VMEM_LIMIT = 48 * 1024 * 1024      # < v7x 64 MiB physical; > v5e/v6e scoped defaults
_VMEM_BUDGET = 44 * 1024 * 1024     # sizing budget (headroom for Mosaic internals)


def _round_up(n, m):
    return ((n + m - 1) // m) * m


def autoencoder_kernel(x_ref,
                       w1_ref, b1_ref,    # D   -> 128 (MXU, bf16/f32 operands, f32 acc)
                       w2t_ref, b2_ref,   # 128 -> 2   (VPU mul + lane reduce; b2 in SMEM)
                       w3_ref, b3_ref,    # 2   -> 128 (VPU 2-term outer product)
                       w4_ref, b4_ref,    # 128 -> D   (MXU, bf16/f32 operands, f32 acc)
                       enc_ref, dec_ref):
    # ---- Encoder: Linear(D,128) -> ReLU (MXU; f32 accumulate) ----
    h1 = jnp.dot(x_ref[...], w1_ref[...], preferred_element_type=jnp.float32)
    h1 = jnp.maximum(h1 + b1_ref[...], 0.0)                       # f32 (TB, 128)

    # ---- Encoder: Linear(128,2) -> Sigmoid ----
    # N=2 on the MXU wastes the array and adds a serial push/pop; do it as two
    # broadcast-multiply + lane reductions (VPU/XLU, f32) instead.
    w2t = w2t_ref[...]                                            # (2, 128) f32
    z0 = jnp.sum(h1 * w2t[0:1, :], axis=-1, keepdims=True) + b2_ref[0]
    z1 = jnp.sum(h1 * w2t[1:2, :], axis=-1, keepdims=True) + b2_ref[1]
    e0 = jax.nn.sigmoid(z0)                                       # (TB, 1) f32
    e1 = jax.nn.sigmoid(z1)                                       # (TB, 1) f32

    # Direct (TB, 2) encode store: 8 B/row of HBM write instead of the old
    # 512 B/row zero-padded slab.
    col = jax.lax.broadcasted_iota(jnp.int32, enc_ref.shape, 1)   # (TB, 2)
    enc_ref[...] = jnp.where(col == 0, e0, e1).astype(enc_ref.dtype)

    # ---- Decoder: Linear(2,128) -> ReLU ----
    # K=2 matmul == 2-term outer product; pure VPU, no MXU round-trip.
    w3 = w3_ref[...]                                              # (2, 128) f32
    h2 = jnp.maximum(e0 * w3[0:1, :] + e1 * w3[1:2, :] + b3_ref[...], 0.0)

    # ---- Decoder: Linear(128,D) (MXU; f32 accumulate) ----
    dec = jnp.dot(h2.astype(w4_ref.dtype), w4_ref[...],
                  preferred_element_type=jnp.float32) + b4_ref[...]
    dec_ref[...] = dec.astype(dec_ref.dtype)


def _choose_block_b(B, D, stream_bytes):
    """D- and VMEM-aware batch tile. Conservatively assumes double buffering."""
    dl = _round_up(D, 128)                       # lane-padded VMEM footprint of D
    # Resident weights/biases; x2 in case the Buffered(1) request is ignored.
    small = (4 * 8 * HIDDEN + 8 * dl) * 4        # b1, b3, w2t, w3, b4 (sublane-padded)
    fixed = 2 * (2 * dl * HIDDEN * stream_bytes + small)          # w1 + w4 (+ small)
    # Streamed per-batch-row bytes, double buffered: x, dec, enc tiles.
    per_row = 2 * (dl * stream_bytes + dl * 4 + HIDDEN * 4)
    avail = _VMEM_BUDGET - fixed
    if avail < _MIN_BB * per_row:
        # TODO(synk): needs the D-tiling path; fall back to the smallest tile.
        vmem_cap = _MIN_BB
    else:
        vmem_cap = (avail // per_row) // _MIN_BB * _MIN_BB
    block_b = min(vmem_cap, 1024, _round_up(B, _MIN_BB))
    if B >= 2 * _MIN_BB:
        # v7x megacore: keep >= 2 grid steps so both TensorCores get work.
        block_b = min(block_b, _round_up(-(-B // 2), _MIN_BB))
    return max(_MIN_BB, block_b)


def _make_specs(block_b, D, single_buffer_weights):
    const = lambda i: (0, 0)
    if single_buffer_weights:
        wspec = lambda shape: pl.BlockSpec(shape, const, pipeline_mode=pl.Buffered(1))
    else:
        wspec = lambda shape: pl.BlockSpec(shape, const)
    in_specs = [
        pl.BlockSpec((block_b, D), lambda i: (i, 0)),           # x: streamed over batch
        wspec((D, HIDDEN)),                                     # w1: resident
        wspec((1, HIDDEN)),                                     # b1
        wspec((LATENT, HIDDEN)),                                # w2^T
        pl.BlockSpec(memory_space=pltpu.MemorySpace.SMEM),      # b2: 2 scalars in SMEM
        wspec((LATENT, HIDDEN)),                                # w3
        wspec((1, HIDDEN)),                                     # b3
        wspec((HIDDEN, D)),                                     # w4: resident
        wspec((1, D)),                                          # b4
    ]
    out_specs = (
        pl.BlockSpec((block_b, LATENT), lambda i: (i, 0)),      # enc: (B, 2) direct
        pl.BlockSpec((block_b, D), lambda i: (i, 0)),           # dec
    )
    return in_specs, out_specs


def autoencoder_forward(x, params, block_b=None, matmul_dtype=jnp.bfloat16):
    """x: [B, D]. params: weights stored [in, out], biases [1, out] (f32)."""
    B, D = x.shape
    stream_bytes = jnp.dtype(matmul_dtype).itemsize
    if block_b is None:
        block_b = _choose_block_b(B, D, stream_bytes)
    block_b = max(_MIN_BB, (block_b // _MIN_BB) * _MIN_BB)
    grid = (pl.cdiv(B, block_b),)          # ragged tail masked by Pallas; no pad/slice

    # In production x / w1 / w4 would already live in bf16 in HBM; these casts
    # are one-time conversions so the kernel itself streams half the bytes.
    x_s = x.astype(matmul_dtype)
    w1 = params["w1"].astype(matmul_dtype)                 # (D, 128)
    w4 = params["w4"].astype(matmul_dtype)                 # (128, D)
    b1 = params["b1"].astype(jnp.float32)                  # (1, 128)
    b3 = params["b3"].astype(jnp.float32)                  # (1, 128)
    b4 = params["b4"].astype(jnp.float32)                  # (1, D)
    w2t = params["w2"].T.astype(jnp.float32)               # (2, 128) VPU broadcast-reduce
    w3 = params["w3"].astype(jnp.float32)                  # (2, 128)
    b2 = params["b2"].reshape(-1).astype(jnp.float32)      # (2,) -> SMEM scalars

    out_shape = (
        jax.ShapeDtypeStruct((B, LATENT), jnp.float32),
        jax.ShapeDtypeStruct((B, D), jnp.float32),
    )
    cp = pltpu.CompilerParams(
        dimension_semantics=("parallel",),                 # megacore / v7x 2-TC sharding
        vmem_limit_bytes=_VMEM_LIMIT,
    )

    def call(single_buffer_weights):
        in_specs, out_specs = _make_specs(block_b, D, single_buffer_weights)
        return pl.pallas_call(
            autoencoder_kernel,
            out_shape=out_shape,
            grid=grid,
            in_specs=in_specs,
            out_specs=out_specs,
            compiler_params=cp,
        )(x_s, w1, b1, w2t, b2, w3, b3, w4, b4)

    try:
        return call(True)
    except Exception:
        # TODO(synk): drop fallback once pl.Buffered(1) weights are verified on target jax.
        return call(False)


def init_params(key, in_dim, hidden=HIDDEN, latent=LATENT):
    """PyTorch-style uniform(-1/sqrt(fan_in), 1/sqrt(fan_in)) init; weights [in, out]."""
    def linear(k, fan_in, fan_out):
        kw, kb = jax.random.split(k)
        bound = 1.0 / jnp.sqrt(fan_in)
        w = jax.random.uniform(kw, (fan_in, fan_out), jnp.float32, -bound, bound)
        b = jax.random.uniform(kb, (1, fan_out), jnp.float32, -bound, bound)
        return w, b

    k1, k2, k3, k4 = jax.random.split(key, 4)
    w1, b1 = linear(k1, in_dim, hidden)    # encoder[0]
    w2, b2 = linear(k2, hidden, latent)    # encoder[2]
    w3, b3 = linear(k3, latent, hidden)    # decoder[0]
    w4, b4 = linear(k4, hidden, in_dim)    # decoder[2]
    return {"w1": w1, "b1": b1, "w2": w2, "b2": b2,
            "w3": w3, "b3": b3, "w4": w4, "b4": b4}


def reference_forward(x, p):
    h1 = jnp.maximum(x @ p["w1"] + p["b1"], 0.0)
    enc = jax.nn.sigmoid(h1 @ p["w2"] + p["b2"])
    h2 = jnp.maximum(enc @ p["w3"] + p["b3"], 0.0)
    dec = h2 @ p["w4"] + p["b4"]
    return enc, dec


if __name__ == "__main__":
    key = jax.random.PRNGKey(0)
    kx, kp, kx2 = jax.random.split(key, 3)

    B, D = 16, 32                      # batch=16, input features=32 (encoder_sizes[0]=32)
    x = jax.random.normal(kx, (B, D), jnp.float32)
    params = init_params(kp, D)
    enc_ref, dec_ref = reference_forward(x, params)

    # 1) Default bf16-streamed path (HBM-bandwidth optimized).
    enc, dec = autoencoder_forward(x, params)
    jax.block_until_ready((enc, dec))
    assert enc.shape == (B, LATENT) and dec.shape == (B, D)
    assert jnp.allclose(enc, enc_ref, atol=5e-2, rtol=5e-2)
    assert jnp.allclose(dec, dec_ref, atol=5e-2, rtol=5e-2)

    # 2) f32 path: exact parity with the reference.
    enc32, dec32 = autoencoder_forward(x, params, matmul_dtype=jnp.float32)
    jax.block_until_ready((enc32, dec32))
    assert jnp.allclose(enc32, enc_ref, atol=1e-4, rtol=1e-4)
    assert jnp.allclose(dec32, dec_ref, atol=1e-4, rtol=1e-4)

    # 3) Ragged batch: exercises >= 2 grid steps + Pallas-masked tail (no pad/slice).
    B2 = 300
    x2 = jax.random.normal(kx2, (B2, D), jnp.float32)
    enc2, dec2 = autoencoder_forward(x2, params)
    jax.block_until_ready((enc2, dec2))
    enc2_ref, dec2_ref = reference_forward(x2, params)
    assert enc2.shape == (B2, LATENT) and dec2.shape == (B2, D)
    assert jnp.allclose(enc2, enc2_ref, atol=5e-2, rtol=5e-2)
    assert jnp.allclose(dec2, dec2_ref, atol=5e-2, rtol=5e-2)

    print("KERNEL_OK")
</pallas_src>

<mosaic_0001>
module attributes {stable_mosaic.version = 11 : i64} {
  func.func @autoencoder_kernel(%arg0: i32, %arg1: memref<16x32xbf16, #tpu.memory_space<vmem>>, %arg2: memref<32x128xbf16, #tpu.memory_space<vmem>>, %arg3: memref<1x128xf32, #tpu.memory_space<vmem>>, %arg4: memref<2x128xf32, #tpu.memory_space<vmem>>, %arg5: memref<2xf32, #tpu.memory_space<smem>>, %arg6: memref<2x128xf32, #tpu.memory_space<vmem>>, %arg7: memref<1x128xf32, #tpu.memory_space<vmem>>, %arg8: memref<128x32xbf16, #tpu.memory_space<vmem>>, %arg9: memref<1x32xf32, #tpu.memory_space<vmem>>, %arg10: memref<16x2xf32, #tpu.memory_space<vmem>>, %arg11: memref<16x32xf32, #tpu.memory_space<vmem>>) attributes {dimension_semantics = [#tpu.dimension_semantics<parallel>], iteration_bounds = array<i64: 1>, scalar_prefetch = 0 : i64, scratch_operands = 0 : i64, tpu.core_type = #tpu.core_type<tc>, window_params = [{transform_indices = @transform_0, window_bounds = array<i64: 16, 32>}, {pipeline_mode = #tpu.pipeline_mode<synchronous>, transform_indices = @transform_1, window_bounds = array<i64: 32, 128>}, {pipeline_mode = #tpu.pipeline_mode<synchronous>, transform_indices = @transform_2, window_bounds = array<i64: 1, 128>}, {pipeline_mode = #tpu.pipeline_mode<synchronous>, transform_indices = @transform_3, window_bounds = array<i64: 2, 128>}, {transform_indices = @transform_4, window_bounds = array<i64: 2>}, {pipeline_mode = #tpu.pipeline_mode<synchronous>, transform_indices = @transform_5, window_bounds = array<i64: 2, 128>}, {pipeline_mode = #tpu.pipeline_mode<synchronous>, transform_indices = @transform_6, window_bounds = array<i64: 1, 128>}, {pipeline_mode = #tpu.pipeline_mode<synchronous>, transform_indices = @transform_7, window_bounds = array<i64: 128, 32>}, {pipeline_mode = #tpu.pipeline_mode<synchronous>, transform_indices = @transform_8, window_bounds = array<i64: 1, 32>}, {transform_indices = @transform_9, window_bounds = array<i64: 16, 2>}, {transform_indices = @transform_10, window_bounds = array<i64: 16, 32>}]} {
    %c0 = arith.constant 0 : index
    %c0_0 = arith.constant 0 : index
    %0 = vector.load %arg1[%c0, %c0_0] : memref<16x32xbf16, #tpu.memory_space<vmem>>, vector<16x32xbf16>
    %c0_1 = arith.constant 0 : index
    %c0_2 = arith.constant 0 : index
    %1 = vector.load %arg2[%c0_1, %c0_2] : memref<32x128xbf16, #tpu.memory_space<vmem>>, vector<32x128xbf16>
    %cst = arith.constant dense<0.000000e+00> : vector<16x128xf32>
    %2 = tpu.matmul %0, %1, %cst {dimension_numbers = #tpu.dot_dimension_numbers<[1], [0], [0], [1], [0, 0, 1, 1], [], []>} : vector<16x32xbf16>, vector<32x128xbf16>, vector<16x128xf32> -> vector<16x128xf32>
    %c0_3 = arith.constant 0 : index
    %c0_4 = arith.constant 0 : index
    %3 = vector.load %arg3[%c0_3, %c0_4] : memref<1x128xf32, #tpu.memory_space<vmem>>, vector<1x128xf32>
    %4 = vector.broadcast %3 : vector<1x128xf32> to vector<16x128xf32>
    %5 = arith.addf %2, %4 : vector<16x128xf32>
    %cst_5 = arith.constant 0.000000e+00 : f32
    %6 = vector.broadcast %cst_5 : f32 to vector<16x128xf32>
    %7 = arith.maximumf %5, %6 : vector<16x128xf32>
    %c0_6 = arith.constant 0 : index
    %c0_7 = arith.constant 0 : index
    %8 = vector.load %arg4[%c0_6, %c0_7] : memref<2x128xf32, #tpu.memory_space<vmem>>, vector<2x128xf32>
    %9 = vector.extract_strided_slice %8 {offsets = [0, 0], sizes = [1, 128], strides = [1, 1]} : vector<2x128xf32> to vector<1x128xf32>
    %10 = vector.broadcast %9 : vector<1x128xf32> to vector<16x128xf32>
    %11 = arith.mulf %7, %10 : vector<16x128xf32>
    %cst_8 = arith.constant dense<0.000000e+00> : vector<16xf32>
    %12 = vector.multi_reduction <add>, %11, %cst_8 [1] : vector<16x128xf32> to vector<16xf32>
    %13 = vector.shape_cast %12 : vector<16xf32> to vector<16x1xf32>
    %c0_9 = arith.constant 0 : index
    %14 = memref.load %arg5[%c0_9] : memref<2xf32, #tpu.memory_space<smem>>
    %15 = vector.broadcast %14 : f32 to vector<16x1xf32>
    %16 = arith.addf %13, %15 : vector<16x1xf32>
    %17 = vector.extract_strided_slice %8 {offsets = [1, 0], sizes = [1, 128], strides = [1, 1]} : vector<2x128xf32> to vector<1x128xf32>
    %18 = vector.broadcast %17 : vector<1x128xf32> to vector<16x128xf32>
    %19 = arith.mulf %7, %18 : vector<16x128xf32>
    %cst_10 = arith.constant dense<0.000000e+00> : vector<16xf32>
    %20 = vector.multi_reduction <add>, %19, %cst_10 [1] : vector<16x128xf32> to vector<16xf32>
    %21 = vector.shape_cast %20 : vector<16xf32> to vector<16x1xf32>
    %c1 = arith.constant 1 : index
    %22 = memref.load %arg5[%c1] : memref<2xf32, #tpu.memory_space<smem>>
    %23 = vector.broadcast %22 : f32 to vector<16x1xf32>
    %24 = arith.addf %21, %23 : vector<16x1xf32>
    %25 = arith.negf %16 : vector<16x1xf32>
    %26 = math.exp %25 : vector<16x1xf32>
    %cst_11 = arith.constant 1.000000e+00 : f32
    %27 = vector.broadcast %cst_11 : f32 to vector<16x1xf32>
    %28 = arith.addf %27, %26 : vector<16x1xf32>
    %29 = arith.divf %27, %28 : vector<16x1xf32>
    %30 = arith.negf %24 : vector<16x1xf32>
    %31 = math.exp %30 : vector<16x1xf32>
    %cst_12 = arith.constant 1.000000e+00 : f32
    %32 = vector.broadcast %cst_12 : f32 to vector<16x1xf32>
    %33 = arith.addf %32, %31 : vector<16x1xf32>
    %34 = arith.divf %32, %33 : vector<16x1xf32>
    %35 = tpu.iota {dimensions = array<i32: 1>} : vector<16x2xi32>
    %c0_i32 = arith.constant 0 : i32
    %36 = vector.broadcast %c0_i32 : i32 to vector<16x2xi32>
    %37 = arith.cmpi eq, %35, %36 : vector<16x2xi32>
    %38 = vector.shape_cast %29 : vector<16x1xf32> to vector<16x1xf32>
    %39 = vector.broadcast %38 : vector<16x1xf32> to vector<16x2xf32>
    %40 = vector.shape_cast %34 : vector<16x1xf32> to vector<16x1xf32>
    %41 = vector.broadcast %40 : vector<16x1xf32> to vector<16x2xf32>
    %42 = arith.select %37, %39, %41 : vector<16x2xi1>, vector<16x2xf32>
    %c0_13 = arith.constant 0 : index
    %c0_14 = arith.constant 0 : index
    %43 = vector.load %arg10[%c0_13, %c0_14] : memref<16x2xf32, #tpu.memory_space<vmem>>, vector<16x2xf32>
    tpu.vector_store %arg10[%c0_13, %c0_14], %42 {strides = array<i32>} : memref<16x2xf32, #tpu.memory_space<vmem>>, vector<16x2xf32>,
    %c0_15 = arith.constant 0 : index
    %c0_16 = arith.constant 0 : index
    %44 = vector.load %arg6[%c0_15, %c0_16] : memref<2x128xf32, #tpu.memory_space<vmem>>, vector<2x128xf32>
    %45 = vector.extract_strided_slice %44 {offsets = [0, 0], sizes = [1, 128], strides = [1, 1]} : vector<2x128xf32> to vector<1x128xf32>
    %46 = vector.broadcast %29 : vector<16x1xf32> to vector<16x128xf32>
    %47 = vector.broadcast %45 : vector<1x128xf32> to vector<16x128xf32>
    %48 = arith.mulf %46, %47 : vector<16x128xf32>
    %49 = vector.extract_strided_slice %44 {offsets = [1, 0], sizes = [1, 128], strides = [1, 1]} : vector<2x128xf32> to vector<1x128xf32>
    %50 = vector.broadcast %34 : vector<16x1xf32> to vector<16x128xf32>
    %51 = vector.broadcast %49 : vector<1x128xf32> to vector<16x128xf32>
    %52 = arith.mulf %50, %51 : vector<16x128xf32>
    %53 = arith.addf %48, %52 : vector<16x128xf32>
    %c0_17 = arith.constant 0 : index
    %c0_18 = arith.constant 0 : index
    %54 = vector.load %arg7[%c0_17, %c0_18] : memref<1x128xf32, #tpu.memory_space<vmem>>, vector<1x128xf32>
    %55 = vector.broadcast %54 : vector<1x128xf32> to vector<16x128xf32>
    %56 = arith.addf %53, %55 : vector<16x128xf32>
    %cst_19 = arith.constant 0.000000e+00 : f32
    %57 = vector.broadcast %cst_19 : f32 to vector<16x128xf32>
    %58 = arith.maximumf %56, %57 : vector<16x128xf32>
    %59 = arith.truncf %58 : vector<16x128xf32> to vector<16x128xbf16>
    %c0_20 = arith.constant 0 : index
    %c0_21 = arith.constant 0 : index
    %60 = vector.load %arg8[%c0_20, %c0_21] : memref<128x32xbf16, #tpu.memory_space<vmem>>, vector<128x32xbf16>
    %cst_22 = arith.constant dense<0.000000e+00> : vector<16x32xf32>
    %61 = tpu.matmul %59, %60, %cst_22 {dimension_numbers = #tpu.dot_dimension_numbers<[1], [0], [0], [1], [0, 0, 1, 1], [], []>} : vector<16x128xbf16>, vector<128x32xbf16>, vector<16x32xf32> -> vector<16x32xf32>
    %c0_23 = arith.constant 0 : index
    %c0_24 = arith.constant 0 : index
    %62 = vector.load %arg9[%c0_23, %c0_24] : memref<1x32xf32, #tpu.memory_space<vmem>>, vector<1x32xf32>
    %63 = vector.broadcast %62 : vector<1x32xf32> to vector<16x32xf32>
    %64 = arith.addf %61, %63 : vector<16x32xf32>
    %c0_25 = arith.constant 0 : index
    %c0_26 = arith.constant 0 : index
    %65 = vector.load %arg11[%c0_25, %c0_26] : memref<16x32xf32, #tpu.memory_space<vmem>>, vector<16x32xf32>
    tpu.vector_store %arg11[%c0_25, %c0_26], %64 {strides = array<i32>} : memref<16x32xf32, #tpu.memory_space<vmem>>, vector<16x32xf32>,
    return
  }
  func.func @transform_0(%arg0: i32) -> (i32, i32) {
    %c0_i32 = arith.constant 0 : i32
    %c0_i32_0 = arith.constant 0 : i32
    return %arg0, %c0_i32 : i32, i32
  }
  func.func @transform_1(%arg0: i32) -> (i32, i32) {
    %c0_i32 = arith.constant 0 : i32
    %c0_i32_0 = arith.constant 0 : i32
    %c0_i32_1 = arith.constant 0 : i32
    return %c0_i32, %c0_i32_0 : i32, i32
  }
  func.func @transform_2(%arg0: i32) -> (i32, i32) {
    %c0_i32 = arith.constant 0 : i32
    %c0_i32_0 = arith.constant 0 : i32
    %c0_i32_1 = arith.constant 0 : i32
    return %c0_i32, %c0_i32_0 : i32, i32
  }
  func.func @transform_3(%arg0: i32) -> (i32, i32) {
    %c0_i32 = arith.constant 0 : i32
    %c0_i32_0 = arith.constant 0 : i32
    %c0_i32_1 = arith.constant 0 : i32
    return %c0_i32, %c0_i32_0 : i32, i32
  }
  func.func @transform_4(%arg0: i32) -> i32 {
    %c0_i32 = arith.constant 0 : i32
    %c0_i32_0 = arith.constant 0 : i32
    return %c0_i32 : i32
  }
  func.func @transform_5(%arg0: i32) -> (i32, i32) {
    %c0_i32 = arith.constant 0 : i32
    %c0_i32_0 = arith.constant 0 : i32
    %c0_i32_1 = arith.constant 0 : i32
    return %c0_i32, %c0_i32_0 : i32, i32
  }
  func.func @transform_6(%arg0: i32) -> (i32, i32) {
    %c0_i32 = arith.constant 0 : i32
    %c0_i32_0 = arith.constant 0 : i32
    %c0_i32_1 = arith.constant 0 : i32
    return %c0_i32, %c0_i32_0 : i32, i32
  }
  func.func @transform_7(%arg0: i32) -> (i32, i32) {
    %c0_i32 = arith.constant 0 : i32
    %c0_i32_0 = arith.constant 0 : i32
    %c0_i32_1 = arith.constant 0 : i32
    return %c0_i32, %c0_i32_0 : i32, i32
  }
  func.func @transform_8(%arg0: i32) -> (i32, i32) {
    %c0_i32 = arith.constant 0 : i32
    %c0_i32_0 = arith.constant 0 : i32
    %c0_i32_1 = arith.constant 0 : i32
    return %c0_i32, %c0_i32_0 : i32, i32
  }
  func.func @transform_9(%arg0: i32) -> (i32, i32) {
    %c0_i32 = arith.constant 0 : i32
    %c0_i32_0 = arith.constant 0 : i32
    return %arg0, %c0_i32 : i32, i32
  }
  func.func @transform_10(%arg0: i32) -> (i32, i32) {
    %c0_i32 = arith.constant 0 : i32
    %c0_i32_0 = arith.constant 0 : i32
    return %arg0, %c0_i32 : i32, i32
  }
}

module attributes {stable_mosaic.version = 11 : i64} {
  func.func @autoencoder_kernel(%arg0: i32, %arg1: memref<16x32xbf16, #tpu.memory_space<vmem>>, %arg2: memref<32x128xbf16, #tpu.memory_space<vmem>>, %arg3: memref<1x128xf32, #tpu.memory_space<vmem>>, %arg4: memref<2x128xf32, #tpu.memory_space<vmem>>, %arg5: memref<2xf32, #tpu.memory_space<smem>>, %arg6: memref<2x128xf32, #tpu.memory_space<vmem>>, %arg7: memref<1x128xf32, #tpu.memory_space<vmem>>, %arg8: memref<128x32xbf16, #tpu.memory_space<vmem>>, %arg9: memref<1x32xf32, #tpu.memory_space<vmem>>, %arg10: memref<16x2xf32, #tpu.memory_space<vmem>>, %arg11: memref<16x32xf32, #tpu.memory_space<vmem>>) attributes {dimension_semantics = [#tpu.dimension_semantics<parallel>], iteration_bounds = array<i64: 1>, scalar_prefetch = 0 : i64, scratch_operands = 0 : i64, tpu.core_type = #tpu.core_type<tc>, window_params = [{transform_indices = @transform_0, window_bounds = array<i64: 16, 32>}, {pipeline_mode = #tpu.pipeline_mode<synchronous>, transform_indices = @transform_1, window_bounds = array<i64: 32, 128>}, {pipeline_mode = #tpu.pipeline_mode<synchronous>, transform_indices = @transform_2, window_bounds = array<i64: 1, 128>}, {pipeline_mode = #tpu.pipeline_mode<synchronous>, transform_indices = @transform_3, window_bounds = array<i64: 2, 128>}, {transform_indices = @transform_4, window_bounds = array<i64: 2>}, {pipeline_mode = #tpu.pipeline_mode<synchronous>, transform_indices = @transform_5, window_bounds = array<i64: 2, 128>}, {pipeline_mode = #tpu.pipeline_mode<synchronous>, transform_indices = @transform_6, window_bounds = array<i64: 1, 128>}, {pipeline_mode = #tpu.pipeline_mode<synchronous>, transform_indices = @transform_7, window_bounds = array<i64: 128, 32>}, {pipeline_mode = #tpu.pipeline_mode<synchronous>, transform_indices = @transform_8, window_bounds = array<i64: 1, 32>}, {transform_indices = @transform_9, window_bounds = array<i64: 16, 2>}, {transform_indices = @transform_10, window_bounds = array<i64: 16, 32>}]} {
    %c0 = arith.constant 0 : index
    %c0_0 = arith.constant 0 : index
    %0 = vector.load %arg1[%c0, %c0_0] : memref<16x32xbf16, #tpu.memory_space<vmem>>, vector<16x32xbf16>
    %c0_1 = arith.constant 0 : index
    %c0_2 = arith.constant 0 : index
    %1 = vector.load %arg2[%c0_1, %c0_2] : memref<32x128xbf16, #tpu.memory_space<vmem>>, vector<32x128xbf16>
    %cst = arith.constant dense<0.000000e+00> : vector<16x128xf32>
    %2 = tpu.matmul %0, %1, %cst {dimension_numbers = #tpu.dot_dimension_numbers<[1], [0], [0], [1], [0, 0, 1, 1], [], []>} : vector<16x32xbf16>, vector<32x128xbf16>, vector<16x128xf32> -> vector<16x128xf32>
    %c0_3 = arith.constant 0 : index
    %c0_4 = arith.constant 0 : index
    %3 = vector.load %arg3[%c0_3, %c0_4] : memref<1x128xf32, #tpu.memory_space<vmem>>, vector<1x128xf32>
    %4 = vector.broadcast %3 : vector<1x128xf32> to vector<16x128xf32>
    %5 = arith.addf %2, %4 : vector<16x128xf32>
    %cst_5 = arith.constant 0.000000e+00 : f32
    %6 = vector.broadcast %cst_5 : f32 to vector<16x128xf32>
    %7 = arith.maximumf %5, %6 : vector<16x128xf32>
    %c0_6 = arith.constant 0 : index
    %c0_7 = arith.constant 0 : index
    %8 = vector.load %arg4[%c0_6, %c0_7] : memref<2x128xf32, #tpu.memory_space<vmem>>, vector<2x128xf32>
    %9 = vector.extract_strided_slice %8 {offsets = [0, 0], sizes = [1, 128], strides = [1, 1]} : vector<2x128xf32> to vector<1x128xf32>
    %10 = vector.broadcast %9 : vector<1x128xf32> to vector<16x128xf32>
    %11 = arith.mulf %7, %10 : vector<16x128xf32>
    %cst_8 = arith.constant dense<0.000000e+00> : vector<16xf32>
    %12 = vector.multi_reduction <add>, %11, %cst_8 [1] : vector<16x128xf32> to vector<16xf32>
    %13 = vector.shape_cast %12 : vector<16xf32> to vector<16x1xf32>
    %c0_9 = arith.constant 0 : index
    %14 = memref.load %arg5[%c0_9] : memref<2xf32, #tpu.memory_space<smem>>
    %15 = vector.broadcast %14 : f32 to vector<16x1xf32>
    %16 = arith.addf %13, %15 : vector<16x1xf32>
    %17 = vector.extract_strided_slice %8 {offsets = [1, 0], sizes = [1, 128], strides = [1, 1]} : vector<2x128xf32> to vector<1x128xf32>
    %18 = vector.broadcast %17 : vector<1x128xf32> to vector<16x128xf32>
    %19 = arith.mulf %7, %18 : vector<16x128xf32>
    %cst_10 = arith.constant dense<0.000000e+00> : vector<16xf32>
    %20 = vector.multi_reduction <add>, %19, %cst_10 [1] : vector<16x128xf32> to vector<16xf32>
    %21 = vector.shape_cast %20 : vector<16xf32> to vector<16x1xf32>
    %c1 = arith.constant 1 : index
    %22 = memref.load %arg5[%c1] : memref<2xf32, #tpu.memory_space<smem>>
    %23 = vector.broadcast %22 : f32 to vector<16x1xf32>
    %24 = arith.addf %21, %23 : vector<16x1xf32>
    %25 = arith.negf %16 : vector<16x1xf32>
    %26 = math.exp %25 : vector<16x1xf32>
    %cst_11 = arith.constant 1.000000e+00 : f32
    %27 = vector.broadcast %cst_11 : f32 to vector<16x1xf32>
    %28 = arith.addf %27, %26 : vector<16x1xf32>
    %29 = arith.divf %27, %28 : vector<16x1xf32>
    %30 = arith.negf %24 : vector<16x1xf32>
    %31 = math.exp %30 : vector<16x1xf32>
    %cst_12 = arith.constant 1.000000e+00 : f32
    %32 = vector.broadcast %cst_12 : f32 to vector<16x1xf32>
    %33 = arith.addf %32, %31 : vector<16x1xf32>
    %34 = arith.divf %32, %33 : vector<16x1xf32>
    %35 = tpu.iota {dimensions = array<i32: 1>} : vector<16x2xi32>
    %c0_i32 = arith.constant 0 : i32
    %36 = vector.broadcast %c0_i32 : i32 to vector<16x2xi32>
    %37 = arith.cmpi eq, %35, %36 : vector<16x2xi32>
    %38 = vector.shape_cast %29 : vector<16x1xf32> to vector<16x1xf32>
    %39 = vector.broadcast %38 : vector<16x1xf32> to vector<16x2xf32>
    %40 = vector.shape_cast %34 : vector<16x1xf32> to vector<16x1xf32>
    %41 = vector.broadcast %40 : vector<16x1xf32> to vector<16x2xf32>
    %42 = arith.select %37, %39, %41 : vector<16x2xi1>, vector<16x2xf32>
    %c0_13 = arith.constant 0 : index
    %c0_14 = arith.constant 0 : index
    %43 = vector.load %arg10[%c0_13, %c0_14] : memref<16x2xf32, #tpu.memory_space<vmem>>, vector<16x2xf32>
    tpu.vector_store %arg10[%c0_13, %c0_14], %42 {strides = array<i32>} : memref<16x2xf32, #tpu.memory_space<vmem>>, vector<16x2xf32>,
    %c0_15 = arith.constant 0 : index
    %c0_16 = arith.constant 0 : index
    %44 = vector.load %arg6[%c0_15, %c0_16] : memref<2x128xf32, #tpu.memory_space<vmem>>, vector<2x128xf32>
    %45 = vector.extract_strided_slice %44 {offsets = [0, 0], sizes = [1, 128], strides = [1, 1]} : vector<2x128xf32> to vector<1x128xf32>
    %46 = vector.broadcast %29 : vector<16x1xf32> to vector<16x128xf32>
    %47 = vector.broadcast %45 : vector<1x128xf32> to vector<16x128xf32>
    %48 = arith.mulf %46, %47 : vector<16x128xf32>
    %49 = vector.extract_strided_slice %44 {offsets = [1, 0], sizes = [1, 128], strides = [1, 1]} : vector<2x128xf32> to vector<1x128xf32>
    %50 = vector.broadcast %34 : vector<16x1xf32> to vector<16x128xf32>
    %51 = vector.broadcast %49 : vector<1x128xf32> to vector<16x128xf32>
    %52 = arith.mulf %50, %51 : vector<16x128xf32>
    %53 = arith.addf %48, %52 : vector<16x128xf32>
    %c0_17 = arith.constant 0 : index
    %c0_18 = arith.constant 0 : index
    %54 = vector.load %arg7[%c0_17, %c0_18] : memref<1x128xf32, #tpu.memory_space<vmem>>, vector<1x128xf32>
    %55 = vector.broadcast %54 : vector<1x128xf32> to vector<16x128xf32>
    %56 = arith.addf %53, %55 : vector<16x128xf32>
    %cst_19 = arith.constant 0.000000e+00 : f32
    %57 = vector.broadcast %cst_19 : f32 to vector<16x128xf32>
    %58 = arith.maximumf %56, %57 : vector<16x128xf32>
    %59 = arith.truncf %58 : vector<16x128xf32> to vector<16x128xbf16>
    %c0_20 = arith.constant 0 : index
    %c0_21 = arith.constant 0 : index
    %60 = vector.load %arg8[%c0_20, %c0_21] : memref<128x32xbf16, #tpu.memory_space<vmem>>, vector<128x32xbf16>
    %cst_22 = arith.constant dense<0.000000e+00> : vector<16x32xf32>
    %61 = tpu.matmul %59, %60, %cst_22 {dimension_numbers = #tpu.dot_dimension_numbers<[1], [0], [0], [1], [0, 0, 1, 1], [], []>} : vector<16x128xbf16>, vector<128x32xbf16>, vector<16x32xf32> -> vector<16x32xf32>
    %c0_23 = arith.constant 0 : index
    %c0_24 = arith.constant 0 : index
    %62 = vector.load %arg9[%c0_23, %c0_24] : memref<1x32xf32, #tpu.memory_space<vmem>>, vector<1x32xf32>
    %63 = vector.broadcast %62 : vector<1x32xf32> to vector<16x32xf32>
    %64 = arith.addf %61, %63 : vector<16x32xf32>
    %c0_25 = arith.constant 0 : index
    %c0_26 = arith.constant 0 : index
    %65 = vector.load %arg11[%c0_25, %c0_26] : memref<16x32xf32, #tpu.memory_space<vmem>>, vector<16x32xf32>
    tpu.vector_store %arg11[%c0_25, %c0_26], %64 {strides = array<i32>} : memref<16x32xf32, #tpu.memory_space<vmem>>, vector<16x32xf32>,
    return
  }
  func.func @transform_0(%arg0: i32) -> (i32, i32) {
    %c0_i32 = arith.constant 0 : i32
    %c0_i32_0 = arith.constant 0 : i32
    return %arg0, %c0_i32 : i32, i32
  }
  func.func @transform_1(%arg0: i32) -> (i32, i32) {
    %c0_i32 = arith.constant 0 : i32
    %c0_i32_0 = arith.constant 0 : i32
    %c0_i32_1 = arith.constant 0 : i32
    return %c0_i32, %c0_i32_0 : i32, i32
  }
  func.func @transform_2(%arg0: i32) -> (i32, i32) {
    %c0_i32 = arith.constant 0 : i32
    %c0_i32_0 = arith.constant 0 : i32
    %c0_i32_1 = arith.constant 0 : i32
    return %c0_i32, %c0_i32_0 : i32, i32
  }
  func.func @transform_3(%arg0: i32) -> (i32, i32) {
    %c0_i32 = arith.constant 0 : i32
    %c0_i32_0 = arith.constant 0 : i32
    %c0_i32_1 = arith.constant 0 : i32
    return %c0_i32, %c0_i32_0 : i32, i32
  }
  func.func @transform_4(%arg0: i32) -> i32 {
    %c0_i32 = arith.constant 0 : i32
    %c0_i32_0 = arith.constant 0 : i32
    return %c0_i32 : i32
  }
  func.func @transform_5(%arg0: i32) -> (i32, i32) {
    %c0_i32 = arith.constant 0 : i32
    %c0_i32_0 = arith.constant 0 : i32
    %c0_i32_1 = arith.constant 0 : i32
    return %c0_i32, %c0_i32_0 : i32, i32
  }
  func.func @transform_6(%arg0: i32) -> (i32, i32) {
    %c0_i32 = arith.constant 0 : i32
    %c0_i32_0 = arith.constant 0 : i32
    %c0_i32_1 = arith.constant 0 : i32
    return %c0_i32, %c0_i32_0 : i32, i32
  }
  func.func @transform_7(%arg0: i32) -> (i32, i32) {
    %c0_i32 = arith.constant 0 : i32
    %c0_i32_0 = arith.constant 0 : i32
    %c0_i32_1 = arith.constant 0 : i32
    return %c0_i32, %c0_i32_0 : i32, i32
  }
  func.func @transform_8(%arg0: i32) -> (i32, i32) {
    %c0_i32 = arith.constant 0 : i32
    %c0_i32_0 = arith.constant 0 : i32
    %c0_i32_1 = arith.constant 0 : i32
    return %c0_i32, %c0_i32_0 : i32, i32
  }
  func.func @transform_9(%arg0: i32) -> (i32, i32) {
    %c0_i32 = arith.constant 0 : i32
    %c0_i32_0 = arith.constant 0 : i32
    return %arg0, %c0_i32 : i32, i32
  }
  func.func @transform_10(%arg0: i32) -> (i32, i32) {
    %c0_i32 = arith.constant 0 : i32
    %c0_i32_0 = arith.constant 0 : i32
    return %arg0, %c0_i32 : i32, i32
  }
}

</mosaic_0001>

<llo_original>
// kernel: tpu_custom_call.1
$region0: #{tpu_custom_call.1}
  #allocation0 [shape = 'u32[]', space=smem, size = 0x4, offset = 0x4, fixed_abs, tag = 'smem constant byte address 0x4 - core index']
  #allocation1 [shape = 'u32[144,128]{1,0:T(1,128)}', space=vmem, size = 0x12000, scoped, tag = 'internal scratch']
  %s0 = inlined_call_operand.vmem [shape: bf16[16,32], index: 0, kind: input, shape index: {}]
  %s1 = inlined_call_operand.vmem [shape: bf16[32,128], index: 1, kind: input, shape index: {}]
  %s2 = inlined_call_operand.vmem [shape: f32[1,128], index: 2, kind: input, shape index: {}]
  %s3 = inlined_call_operand.vmem [shape: f32[2,128], index: 3, kind: input, shape index: {}]
  %s4 = inlined_call_operand.vmem [shape: f32[2], index: 4, kind: input, shape index: {}]
  %s5 = inlined_call_operand.vmem [shape: f32[2,128], index: 5, kind: input, shape index: {}]
  %s6 = inlined_call_operand.vmem [shape: f32[1,128], index: 6, kind: input, shape index: {}]
  %s7 = inlined_call_operand.vmem [shape: bf16[128,32], index: 7, kind: input, shape index: {}]
  %s8 = inlined_call_operand.vmem [shape: f32[1,32], index: 8, kind: input, shape index: {}]
  %s9 = inlined_call_operand.vmem [shape: f32[16,2], index: 9, kind: output, shape index: {0}]
  %s10 = inlined_call_operand.hbm [shape: f32[16,32], index: 10, kind: output, shape index: {1}]
  %11 = xla_tuple %s9, %s10
  %s12 = sld [smem:[#allocation0]]
  $region58: #{tpu_custom_call.1} parent=0
    _
  %s14 = ssub.s32 1, %s12
  %s15 = scalar_select 0, %s14, %s12
  $region1: #{tpu_custom_call.1} parent=0
    #allocation2 [shape = 'u8[512]{0}', space=smem, size = 0x200, scoped, tag = 'input window, operand 4, single buffered']
    #allocation3 [shape = 's32[1]{0}', space=sflag, size = 0x4, scoped, tag = 'scoped memory for tpu_custom_call.1']
    #allocation4 [shape = 's32[1]{0}', space=sflag, size = 0x4, scoped, tag = 'scoped memory for tpu_custom_call.1']
    #allocation5 [shape = 'u8[8192]{0}', space=vmem, size = 0x2000, scoped, tag = 'output window, operand 1, single buffered']
    %16 = vsyncpa [#allocation4], 0
    %17 = vsyncpa [#allocation3], 0
    // Predicated region
    $region2: #{tpu_custom_call.1} parent=1 // pred_check
      _
    $region3: #{tpu_custom_call.1} parent=1 // pred_check_branch
      %19 = sbr.rel (0) target = $region5
    $region4: #{tpu_custom_call.1} parent=1 // pred_region
      _
    $region5: #{tpu_custom_call.1} parent=1 // pred_fallthru
      _
    // Predicated region
    $region6: #{tpu_custom_call.1} parent=1 // pred_check
      _
    $region7: #{tpu_custom_call.1} parent=1 // pred_check_branch
      %21 = sbr.rel (0) target = $region9
    $region8: #{tpu_custom_call.1} parent=1 // pred_region
      _
    $region9: #{tpu_custom_call.1} parent=1 // pred_fallthru
      _
    // Predicated region
    $region10: #{tpu_custom_call.1} parent=1 // pred_check
      _
    $region11: #{tpu_custom_call.1} parent=1 // pred_check_branch
      %23 = sbr.rel (0) target = $region13
    $region12: #{tpu_custom_call.1} parent=1 // pred_region
      _
    $region13: #{tpu_custom_call.1} parent=1 // pred_fallthru
      _
    // Predicated region
    $region14: #{tpu_custom_call.1} parent=1 // pred_check
      _
    $region15: #{tpu_custom_call.1} parent=1 // pred_check_branch
      %25 = sbr.rel (0) target = $region17
    $region16: #{tpu_custom_call.1} parent=1 // pred_region
      _
    $region17: #{tpu_custom_call.1} parent=1 // pred_fallthru
      _
    // Predicated region
    $region18: #{tpu_custom_call.1} parent=1 // pred_check
      _
    $region19: #{tpu_custom_call.1} parent=1 // pred_check_branch
      %27 = sbr.rel (0) target = $region21
    $region20: #{tpu_custom_call.1} parent=1 // pred_region
      %s29 = ssub.s32 16, 16
      %30 = vsyncadd [#allocation4], %s29
      %s32 = sshll.u32 %s4, 4
      %s33 = int_to_ptr.vmem [resolvable:$true] %s32
      %35 = dma.vmem_to_smem %s33, 16, [#allocation2], [#allocation4]
    $region21: #{tpu_custom_call.1} parent=1 // pred_fallthru
      _
    // Predicated region
    $region22: #{tpu_custom_call.1} parent=1 // pred_check
      _
    $region23: #{tpu_custom_call.1} parent=1 // pred_check_branch
      %37 = sbr.rel (0) target = $region25
    $region24: #{tpu_custom_call.1} parent=1 // pred_region
      _
    $region25: #{tpu_custom_call.1} parent=1 // pred_fallthru
      _
    // Predicated region
    $region26: #{tpu_custom_call.1} parent=1 // pred_check
      _
    $region27: #{tpu_custom_call.1} parent=1 // pred_check_branch
      %39 = sbr.rel (0) target = $region29
    $region28: #{tpu_custom_call.1} parent=1 // pred_region
      _
    $region29: #{tpu_custom_call.1} parent=1 // pred_fallthru
      _
    // Predicated region
    $region30: #{tpu_custom_call.1} parent=1 // pred_check
      _
    $region31: #{tpu_custom_call.1} parent=1 // pred_check_branch
      %41 = sbr.rel (0) target = $region33
    $region32: #{tpu_custom_call.1} parent=1 // pred_region
      _
    $region33: #{tpu_custom_call.1} parent=1 // pred_fallthru
      _
    // Predicated region
    $region34: #{tpu_custom_call.1} parent=1 // pred_check
      _
    $region35: #{tpu_custom_call.1} parent=1 // pred_check_branch
      %43 = sbr.rel (0) target = $region37
    $region36: #{tpu_custom_call.1} parent=1 // pred_region
      _
    $region37: #{tpu_custom_call.1} parent=1 // pred_fallthru
      _
    // Predicated region
    $region38: #{tpu_custom_call.1} parent=1 // pred_check
      _
    $region39: #{tpu_custom_call.1} parent=1 // pred_check_branch
      %45 = sbr.rel (0) target = $region41
    $region40: #{tpu_custom_call.1} parent=1 // pred_region
      %46 = dma.done [#allocation4], 16
    $region41: #{tpu_custom_call.1} parent=1 // pred_fallthru
      _
    %47 = sfence
    %v49 = vld [vmem:[%s0] sm:$0xf]
    %v50 = vld [vmem:[%s0 + $0x4] sm:$0xf]
    %v51 = vld [vmem:[%s1] sm:$0xf]
    %v52 = vld [vmem:[%s1 + $0x4] sm:$0xf]
    %v53 = vld [vmem:[%s1 + $0x8] sm:$0xf]
    %v54 = vld [vmem:[%s1 + $0xc] sm:$0xf]
    %v55 = vld [vmem:[%s2] sm:$0x1]
    %v57 = vlaneseq
    %v58 = vshrl.u32 %v57, 7
    %v59 = vsub.s32 0, %v58
    %v60 = vrot.slane %v55, %v59
    %v64 = vunpack.c.l.b16 %v49
    %v65 = vunpack.c.l.b16 %v50
    %v66 = vpack.c.b16 %v65, %v64
    %v71 = vunpack.c.l.b16 %v51
    %v72 = vunpack.c.l.b16 %v52
    %v73 = vunpack.c.l.b16 %v53
    %v74 = vunpack.c.l.b16 %v54
    %v75 = vpack.c.b16 %v72, %v71
    %v76 = vpack.c.b16 %v74, %v73
    %vm79 = vcmask 261120
    %v81 = vsel %vm79, %v66, 0
    %83 = vmatprep.subr.bf16.mxu0 0
    %84 = vmatpush1.bf16.msra.mxu0 0
    %85 = vmatprep.subr.bf16.mxu0 0
    %86 = vmatpush1.bf16.msra.mxu0 0
    %87 = vmatprep.subr.bf16.mxu0 0
    %88 = vmatpush1.bf16.msra.mxu0 0
    %89 = vmatprep.subr.bf16.mxu0 0
    %90 = vmatpush1.bf16.msra.mxu0 0
    %91 = vmatprep.subr.bf16.mxu0 0
    %92 = vmatpush1.bf16.msra.mxu0 0
    %93 = vmatprep.subr.bf16.mxu0 0
    %94 = vmatpush1.bf16.msra.mxu0 0
    %95 = vmatprep.subr.bf16.mxu0 0
    %96 = vmatpush1.bf16.msra.mxu0 %v76
    %97 = vmatprep.subr.bf16.mxu0 0
    %98 = vmatpush1.bf16.msra.mxu0 %v75
    %99 = vmatprep.subr.bf16.mxu0 0
    %100 = vmatpush2.bf16.msra.mxu0 0
    %101 = vmatprep.subr.bf16.mxu0 0
    %102 = vmatpush2.bf16.msra.mxu0 0
    %103 = vmatprep.subr.bf16.mxu0 0
    %104 = vmatpush2.bf16.msra.mxu0 0
    %105 = vmatprep.subr.bf16.mxu0 0
    %106 = vmatpush2.bf16.msra.mxu0 0
    %107 = vmatprep.subr.bf16.mxu0 0
    %108 = vmatpush2.bf16.msra.mxu0 0
    %109 = vmatprep.subr.bf16.mxu0 0
    %110 = vmatpush2.bf16.msra.mxu0 0
    %111 = vmatprep.subr.bf16.mxu0 0
    %112 = vmatpush2.bf16.msra.mxu0 0
    %113 = vmatprep.subr.bf16.mxu0 0
    %114 = vmatpush2.bf16.msra.mxu0 0
    %115 = vmatprep.mubr.bf16.mxu0 0
    %116 = vmatmul.mubr.bf16.gmra.mxu0 %v81
    %v117 = vpop.f32.mrf.mxu0
    %v118 = vadd.f32 %v60, %v117
    %v119 = vpop.f32.mrf.mxu0
    %v120 = vpop.f32.mrf.mxu0
    %v121 = vadd.f32 %v60, %v120
    %v122 = vpop.f32.mrf.mxu0
    %123 = vdwg.mxu0
    %v124 = vmax.f32 %v118, 0.0
    %v125 = vmax.f32 %v121, 0.0
    %v126 = vld [vmem:[%s3] sm:$0x3]
    %v127 = vlaneseq
    %v128 = vshrl.u32 %v127, 7
    %v129 = vsub.s32 0, %v128
    %v130 = vrot.slane %v126, %v129
    %v131 = vmul.f32 %v124, %v130
    %v132 = vmul.f32 %v125, %v130
    %133 = vadd.xlane.f32.xlu0 %v131
    %v134 = vpop.xlane.xlu0 %133
    %135 = vadd.xlane.f32.xlu0 %v132
    %v136 = vpop.xlane.xlu0 %135
    %s137 = sld [smem:[#allocation2]]
    %v138 = vstv %s137
    %v139 = vadd.f32 %v134, %v138
    %v140 = vadd.f32 %v136, %v138
    %v141 = vlaneseq
    %v142 = vshrl.u32 %v141, 7
    %v143 = vsub.s32 1, %v142
    %v144 = vrot.slane %v126, %v143
    %v145 = vmul.f32 %v124, %v144
    %v146 = vmul.f32 %v125, %v144
    %147 = vadd.xlane.f32.xlu0 %v145
    %v148 = vpop.xlane.xlu0 %147
    %149 = vadd.xlane.f32.xlu0 %v146
    %v150 = vpop.xlane.xlu0 %149
    %s151 = sld [smem:[#allocation2 + $0x1]]
    %v152 = vstv %s151
    %v153 = vadd.f32 %v148, %v152
    %v154 = vadd.f32 %v150, %v152
    %v155 = vxor.u32 %v139, 2147483648
    %v156 = vxor.u32 %v140, 2147483648
    %v157 = vmul.f32 %v155, 1.442695
    %v158 = vpow.pop %v157
    %v159 = vmul.f32 %v156, 1.442695
    %v160 = vpow.pop %v159
    %v161 = vadd.f32 %v158, 1.0
    %v162 = vadd.f32 %v160, 1.0
    %v163 = vrcp.pop %v161
    %v164 = vmul.f32 1.0, %v163
    %v165 = vrcp.pop %v162
    %v166 = vmul.f32 1.0, %v165
    %v167 = vxor.u32 %v153, 2147483648
    %v168 = vxor.u32 %v154, 2147483648
    %v169 = vmul.f32 %v167, 1.442695
    %v170 = vpow.pop %v169
    %v171 = vmul.f32 %v168, 1.442695
    %v172 = vpow.pop %v171
    %v173 = vadd.f32 %v170, 1.0
    %v174 = vadd.f32 %v172, 1.0
    %v175 = vrcp.pop %v173
    %v176 = vmul.f32 1.0, %v175
    %v177 = vrcp.pop %v174
    %v178 = vmul.f32 1.0, %v177
    %v179 = vlaneseq
    %v180 = vand.u32 %v179, 127
    %vm181 = vcmp.eq.s32.totalorder %v180, 0
    %v182 = vsel %vm181, %v164, %v176
    %v183 = vsel %vm181, %v166, %v178
    %vm184 = vcmask 15360
    %185 = vst.msk [vmem:[%s9] sm:$0xff] %vm184, %v182
    %186 = vst.msk [vmem:[%s9 + $0x8] sm:$0xff] %vm184, %v183
    %v187 = vld [vmem:[%s5] sm:$0x3]
    %v188 = vlaneseq
    %v189 = vshrl.u32 %v188, 7
    %v190 = vsub.s32 0, %v189
    %v191 = vrot.slane %v187, %v190
    %v192 = vmul.f32 %v164, %v191
    %v193 = vmul.f32 %v166, %v191
    %v194 = vlaneseq
    %v195 = vshrl.u32 %v194, 7
    %v196 = vsub.s32 1, %v195
    %v197 = vrot.slane %v187, %v196
    %v198 = vmul.f32 %v176, %v197
    %v199 = vmul.f32 %v178, %v197
    %v200 = vadd.f32 %v192, %v198
    %v201 = vadd.f32 %v193, %v199
    %v202 = vld [vmem:[%s6] sm:$0x1]
    %v204 = vlaneseq
    %v205 = vshrl.u32 %v204, 7
    %v206 = vsub.s32 0, %v205
    %v207 = vrot.slane %v202, %v206
    %v209 = vadd.f32 %v200, %v207
    %v210 = vadd.f32 %v201, %v207
    %v211 = vmax.f32 %v209, 0.0
    %v212 = vmax.f32 %v210, 0.0
    %v213 = vpack.c.bf16 %v212, %v211
    %v214 = vld [vmem:[%s7] sm:$0xf]
    %v215 = vld [vmem:[%s7 + $0x4] sm:$0xf]
    %v216 = vld [vmem:[%s7 + $0x8] sm:$0xf]
    %v217 = vld [vmem:[%s7 + $0xc] sm:$0xf]
    %v218 = vld [vmem:[%s7 + $0x10] sm:$0xf]
    %v219 = vld [vmem:[%s7 + $0x14] sm:$0xf]
    %v220 = vld [vmem:[%s7 + $0x18] sm:$0xf]
    %v221 = vld [vmem:[%s7 + $0x1c] sm:$0xf]
    %v222 = vld [vmem:[%s7 + $0x20] sm:$0xf]
    %v223 = vld [vmem:[%s7 + $0x24] sm:$0xf]
    %v224 = vld [vmem:[%s7 + $0x28] sm:$0xf]
    %v225 = vld [vmem:[%s7 + $0x2c] sm:$0xf]
    %v226 = vld [vmem:[%s7 + $0x30] sm:$0xf]
    %v227 = vld [vmem:[%s7 + $0x34] sm:$0xf]
    %v228 = vld [vmem:[%s7 + $0x38] sm:$0xf]
    %v229 = vld [vmem:[%s7 + $0x3c] sm:$0xf]
    %v230 = vld [vmem:[%s8] sm:$0x1]
    %v232 = vlaneseq
    %v233 = vshrl.u32 %v232, 7
    %v234 = vsub.s32 0, %v233
    %v235 = vrot.slane %v230, %v234
    %v253 = vunpack.c.l.b16 %v214
    %v254 = vunpack.c.l.b16 %v215
    %v255 = vunpack.c.l.b16 %v216
    %v256 = vunpack.c.l.b16 %v217
    %v257 = vunpack.c.l.b16 %v218
    %v258 = vunpack.c.l.b16 %v219
    %v259 = vunpack.c.l.b16 %v220
    %v260 = vunpack.c.l.b16 %v221
    %v261 = vunpack.c.l.b16 %v222
    %v262 = vunpack.c.l.b16 %v223
    %v263 = vunpack.c.l.b16 %v224
    %v264 = vunpack.c.l.b16 %v225
    %v265 = vunpack.c.l.b16 %v226
    %v266 = vunpack.c.l.b16 %v227
    %v267 = vunpack.c.l.b16 %v228
    %v268 = vunpack.c.l.b16 %v229
    %v269 = vpack.c.b16 %v254, %v253
    %v270 = vpack.c.b16 %v256, %v255
    %v271 = vpack.c.b16 %v258, %v257
    %v272 = vpack.c.b16 %v260, %v259
    %v273 = vpack.c.b16 %v262, %v261
    %v274 = vpack.c.b16 %v264, %v263
    %v275 = vpack.c.b16 %v266, %v265
    %v276 = vpack.c.b16 %v268, %v267
    %285 = vmatprep.subr.bf16.mxu0 0
    %286 = vmatpush1.bf16.msra.mxu0 %v276
    %287 = vmatprep.subr.bf16.mxu0 0
    %288 = vmatpush1.bf16.msra.mxu0 %v275
    %289 = vmatprep.subr.bf16.mxu0 0
    %290 = vmatpush1.bf16.msra.mxu0 %v274
    %291 = vmatprep.subr.bf16.mxu0 0
    %292 = vmatpush1.bf16.msra.mxu0 %v273
    %293 = vmatprep.subr.bf16.mxu0 0
    %294 = vmatpush1.bf16.msra.mxu0 %v272
    %295 = vmatprep.subr.bf16.mxu0 0
    %296 = vmatpush1.bf16.msra.mxu0 %v271
    %297 = vmatprep.subr.bf16.mxu0 0
    %298 = vmatpush1.bf16.msra.mxu0 %v270
    %299 = vmatprep.subr.bf16.mxu0 0
    %300 = vmatpush1.bf16.msra.mxu0 %v269
    %301 = vmatprep.subr.bf16.mxu0 0
    %302 = vmatpush2.bf16.msra.mxu0 0
    %303 = vmatprep.subr.bf16.mxu0 0
    %304 = vmatpush2.bf16.msra.mxu0 0
    %305 = vmatprep.subr.bf16.mxu0 0
    %306 = vmatpush2.bf16.msra.mxu0 0
    %307 = vmatprep.subr.bf16.mxu0 0
    %308 = vmatpush2.bf16.msra.mxu0 0
    %309 = vmatprep.subr.bf16.mxu0 0
    %310 = vmatpush2.bf16.msra.mxu0 0
    %311 = vmatprep.subr.bf16.mxu0 0
    %312 = vmatpush2.bf16.msra.mxu0 0
    %313 = vmatprep.subr.bf16.mxu0 0
    %314 = vmatpush2.bf16.msra.mxu0 0
    %315 = vmatprep.subr.bf16.mxu0 0
    %316 = vmatpush2.bf16.msra.mxu0 0
    %317 = vmatprep.mubr.bf16.mxu0 0
    %318 = vmatmul.mubr.bf16.gmra.mxu0 %v213
    %v319 = vpop.f32.mrf.mxu0
    %v320 = vadd.f32 %v235, %v319
    %v321 = vpop.f32.mrf.mxu0
    %v322 = vpop.f32.mrf.mxu0
    %v323 = vadd.f32 %v235, %v322
    %v324 = vpop.f32.mrf.mxu0
    %325 = vdwg.mxu0
    %326 = vst.msk [vmem:[#allocation5] sm:$0xff] %vm79, %v320
    %327 = vst.msk [vmem:[#allocation5 + $0x8] sm:$0xff] %vm79, %v323
    // Predicated region
    $region42: #{tpu_custom_call.1} parent=1 // pred_check
      _
    $region43: #{tpu_custom_call.1} parent=1 // pred_check_branch
      %329 = sbr.rel (0) target = $region45
    $region44: #{tpu_custom_call.1} parent=1 // pred_region
      _
    $region45: #{tpu_custom_call.1} parent=1 // pred_fallthru
      _
    // Predicated region
    $region46: #{tpu_custom_call.1} parent=1 // pred_check
      _
    $region47: #{tpu_custom_call.1} parent=1 // pred_check_branch
      %331 = sbr.rel (0) target = $region49
    $region48: #{tpu_custom_call.1} parent=1 // pred_region
      %s333 = ssub.s32 256, 256
      %334 = vsyncadd [#allocation3], %s333
      %s335 = sshll.u32 [#allocation5], 4
      %s336 = int_to_ptr.vmem [resolvable:$true] %s335
      %341 = dma.vmem_to_hbm [thread:$0]  %s336, 256, %s10, [#allocation3], 128, 128, 8
    $region49: #{tpu_custom_call.1} parent=1 // pred_fallthru
      _
    // Predicated region
    $region50: #{tpu_custom_call.1} parent=1 // pred_check
      _
    $region51: #{tpu_custom_call.1} parent=1 // pred_check_branch
      %343 = sbr.rel (0) target = $region53
    $region52: #{tpu_custom_call.1} parent=1 // pred_region
      _
    $region53: #{tpu_custom_call.1} parent=1 // pred_fallthru
      _
    // Predicated region
    $region54: #{tpu_custom_call.1} parent=1 // pred_check
      _
    $region55: #{tpu_custom_call.1} parent=1 // pred_check_branch
      %345 = sbr.rel (0) target = $region57
    $region56: #{tpu_custom_call.1} parent=1 // pred_region
      %346 = dma.done [#allocation3], 256
    $region57: #{tpu_custom_call.1} parent=1 // pred_fallthru
      _
    %347 = vsyncpa [#allocation3], 1
    %348 = vsyncpa [#allocation4], 1

// kernel: tpu_custom_call.1
$region0: #{tpu_custom_call.1}
  #allocation0 [shape = 'u32[]', space=smem, size = 0x4, offset = 0x4, fixed_abs, tag = 'smem constant byte address 0x4 - core index']
  #allocation1 [shape = 'u32[144,128]{1,0:T(1,128)}', space=vmem, size = 0x12000, scoped, tag = 'internal scratch']
  %s0 = inlined_call_operand.vmem [shape: bf16[16,32], index: 0, kind: input, shape index: {}]
  %s1 = inlined_call_operand.vmem [shape: bf16[32,128], index: 1, kind: input, shape index: {}]
  %s2 = inlined_call_operand.vmem [shape: f32[1,128], index: 2, kind: input, shape index: {}]
  %s3 = inlined_call_operand.vmem [shape: f32[2,128], index: 3, kind: input, shape index: {}]
  %s4 = inlined_call_operand.vmem [shape: f32[2], index: 4, kind: input, shape index: {}]
  %s5 = inlined_call_operand.vmem [shape: f32[2,128], index: 5, kind: input, shape index: {}]
  %s6 = inlined_call_operand.vmem [shape: f32[1,128], index: 6, kind: input, shape index: {}]
  %s7 = inlined_call_operand.vmem [shape: bf16[128,32], index: 7, kind: input, shape index: {}]
  %s8 = inlined_call_operand.vmem [shape: f32[1,32], index: 8, kind: input, shape index: {}]
  %s9 = inlined_call_operand.vmem [shape: f32[16,2], index: 9, kind: output, shape index: {0}]
  %s10 = inlined_call_operand.hbm [shape: f32[16,32], index: 10, kind: output, shape index: {1}]
  %11 = xla_tuple %s9, %s10
  %s12 = sld [smem:[#allocation0]]
  $region58: #{tpu_custom_call.1} parent=0
    _
  %s14 = ssub.s32 1, %s12
  %s15 = scalar_select 0, %s14, %s12
  $region1: #{tpu_custom_call.1} parent=0
    #allocation2 [shape = 'u8[512]{0}', space=smem, size = 0x200, scoped, tag = 'input window, operand 4, single buffered']
    #allocation3 [shape = 's32[1]{0}', space=sflag, size = 0x4, scoped, tag = 'scoped memory for tpu_custom_call.1']
    #allocation4 [shape = 's32[1]{0}', space=sflag, size = 0x4, scoped, tag = 'scoped memory for tpu_custom_call.1']
    #allocation5 [shape = 'u8[8192]{0}', space=vmem, size = 0x2000, scoped, tag = 'output window, operand 1, single buffered']
    %16 = vsyncpa [#allocation4], 0
    %17 = vsyncpa [#allocation3], 0
    // Predicated region
    $region2: #{tpu_custom_call.1} parent=1 // pred_check
      _
    $region3: #{tpu_custom_call.1} parent=1 // pred_check_branch
      %19 = sbr.rel (0) target = $region5
    $region4: #{tpu_custom_call.1} parent=1 // pred_region
      _
    $region5: #{tpu_custom_call.1} parent=1 // pred_fallthru
      _
    // Predicated region
    $region6: #{tpu_custom_call.1} parent=1 // pred_check
      _
    $region7: #{tpu_custom_call.1} parent=1 // pred_check_branch
      %21 = sbr.rel (0) target = $region9
    $region8: #{tpu_custom_call.1} parent=1 // pred_region
      _
    $region9: #{tpu_custom_call.1} parent=1 // pred_fallthru
      _
    // Predicated region
    $region10: #{tpu_custom_call.1} parent=1 // pred_check
      _
    $region11: #{tpu_custom_call.1} parent=1 // pred_check_branch
      %23 = sbr.rel (0) target = $region13
    $region12: #{tpu_custom_call.1} parent=1 // pred_region
      _
    $region13: #{tpu_custom_call.1} parent=1 // pred_fallthru
      _
    // Predicated region
    $region14: #{tpu_custom_call.1} parent=1 // pred_check
      _
    $region15: #{tpu_custom_call.1} parent=1 // pred_check_branch
      %25 = sbr.rel (0) target = $region17
    $region16: #{tpu_custom_call.1} parent=1 // pred_region
      _
    $region17: #{tpu_custom_call.1} parent=1 // pred_fallthru
      _
    // Predicated region
    $region18: #{tpu_custom_call.1} parent=1 // pred_check
      _
    $region19: #{tpu_custom_call.1} parent=1 // pred_check_branch
      %27 = sbr.rel (0) target = $region21
    $region20: #{tpu_custom_call.1} parent=1 // pred_region
      %s29 = ssub.s32 16, 16
      %30 = vsyncadd [#allocation4], %s29
      %s32 = sshll.u32 %s4, 4
      %s33 = int_to_ptr.vmem [resolvable:$true] %s32
      %35 = dma.vmem_to_smem %s33, 16, [#allocation2], [#allocation4]
    $region21: #{tpu_custom_call.1} parent=1 // pred_fallthru
      _
    // Predicated region
    $region22: #{tpu_custom_call.1} parent=1 // pred_check
      _
    $region23: #{tpu_custom_call.1} parent=1 // pred_check_branch
      %37 = sbr.rel (0) target = $region25
    $region24: #{tpu_custom_call.1} parent=1 // pred_region
      _
    $region25: #{tpu_custom_call.1} parent=1 // pred_fallthru
      _
    // Predicated region
    $region26: #{tpu_custom_call.1} parent=1 // pred_check
      _
    $region27: #{tpu_custom_call.1} parent=1 // pred_check_branch
      %39 = sbr.rel (0) target = $region29
    $region28: #{tpu_custom_call.1} parent=1 // pred_region
      _
    $region29: #{tpu_custom_call.1} parent=1 // pred_fallthru
      _
    // Predicated region
    $region30: #{tpu_custom_call.1} parent=1 // pred_check
      _
    $region31: #{tpu_custom_call.1} parent=1 // pred_check_branch
      %41 = sbr.rel (0) target = $region33
    $region32: #{tpu_custom_call.1} parent=1 // pred_region
      _
    $region33: #{tpu_custom_call.1} parent=1 // pred_fallthru
      _
    // Predicated region
    $region34: #{tpu_custom_call.1} parent=1 // pred_check
      _
    $region35: #{tpu_custom_call.1} parent=1 // pred_check_branch
      %43 = sbr.rel (0) target = $region37
    $region36: #{tpu_custom_call.1} parent=1 // pred_region
      _
    $region37: #{tpu_custom_call.1} parent=1 // pred_fallthru
      _
    // Predicated region
    $region38: #{tpu_custom_call.1} parent=1 // pred_check
      _
    $region39: #{tpu_custom_call.1} parent=1 // pred_check_branch
      %45 = sbr.rel (0) target = $region41
    $region40: #{tpu_custom_call.1} parent=1 // pred_region
      %46 = dma.done [#allocation4], 16
    $region41: #{tpu_custom_call.1} parent=1 // pred_fallthru
      _
    %47 = sfence
    %v49 = vld [vmem:[%s0] sm:$0xf]
    %v50 = vld [vmem:[%s0 + $0x4] sm:$0xf]
    %v51 = vld [vmem:[%s1] sm:$0xf]
    %v52 = vld [vmem:[%s1 + $0x4] sm:$0xf]
    %v53 = vld [vmem:[%s1 + $0x8] sm:$0xf]
    %v54 = vld [vmem:[%s1 + $0xc] sm:$0xf]
    %v55 = vld [vmem:[%s2] sm:$0x1]
    %v57 = vlaneseq
    %v58 = vshrl.u32 %v57, 7
    %v59 = vsub.s32 0, %v58
    %v60 = vrot.slane %v55, %v59
    %v64 = vunpack.c.l.b16 %v49
    %v65 = vunpack.c.l.b16 %v50
    %v66 = vpack.c.b16 %v65, %v64
    %v71 = vunpack.c.l.b16 %v51
    %v72 = vunpack.c.l.b16 %v52
    %v73 = vunpack.c.l.b16 %v53
    %v74 = vunpack.c.l.b16 %v54
    %v75 = vpack.c.b16 %v72, %v71
    %v76 = vpack.c.b16 %v74, %v73
    %vm79 = vcmask 261120
    %v81 = vsel %vm79, %v66, 0
    %83 = vmatprep.subr.bf16.mxu0 0
    %84 = vmatpush1.bf16.msra.mxu0 0
    %85 = vmatprep.subr.bf16.mxu0 0
    %86 = vmatpush1.bf16.msra.mxu0 0
    %87 = vmatprep.subr.bf16.mxu0 0
    %88 = vmatpush1.bf16.msra.mxu0 0
    %89 = vmatprep.subr.bf16.mxu0 0
    %90 = vmatpush1.bf16.msra.mxu0 0
    %91 = vmatprep.subr.bf16.mxu0 0
    %92 = vmatpush1.bf16.msra.mxu0 0
    %93 = vmatprep.subr.bf16.mxu0 0
    %94 = vmatpush1.bf16.msra.mxu0 0
    %95 = vmatprep.subr.bf16.mxu0 0
    %96 = vmatpush1.bf16.msra.mxu0 %v76
    %97 = vmatprep.subr.bf16.mxu0 0
    %98 = vmatpush1.bf16.msra.mxu0 %v75
    %99 = vmatprep.subr.bf16.mxu0 0
    %100 = vmatpush2.bf16.msra.mxu0 0
    %101 = vmatprep.subr.bf16.mxu0 0
    %102 = vmatpush2.bf16.msra.mxu0 0
    %103 = vmatprep.subr.bf16.mxu0 0
    %104 = vmatpush2.bf16.msra.mxu0 0
    %105 = vmatprep.subr.bf16.mxu0 0
    %106 = vmatpush2.bf16.msra.mxu0 0
    %107 = vmatprep.subr.bf16.mxu0 0
    %108 = vmatpush2.bf16.msra.mxu0 0
    %109 = vmatprep.subr.bf16.mxu0 0
    %110 = vmatpush2.bf16.msra.mxu0 0
    %111 = vmatprep.subr.bf16.mxu0 0
    %112 = vmatpush2.bf16.msra.mxu0 0
    %113 = vmatprep.subr.bf16.mxu0 0
    %114 = vmatpush2.bf16.msra.mxu0 0
    %115 = vmatprep.mubr.bf16.mxu0 0
    %116 = vmatmul.mubr.bf16.gmra.mxu0 %v81
    %v117 = vpop.f32.mrf.mxu0
    %v118 = vadd.f32 %v60, %v117
    %v119 = vpop.f32.mrf.mxu0
    %v120 = vpop.f32.mrf.mxu0
    %v121 = vadd.f32 %v60, %v120
    %v122 = vpop.f32.mrf.mxu0
    %123 = vdwg.mxu0
    %v124 = vmax.f32 %v118, 0.0
    %v125 = vmax.f32 %v121, 0.0
    %v126 = vld [vmem:[%s3] sm:$0x3]
    %v127 = vlaneseq
    %v128 = vshrl.u32 %v127, 7
    %v129 = vsub.s32 0, %v128
    %v130 = vrot.slane %v126, %v129
    %v131 = vmul.f32 %v124, %v130
    %v132 = vmul.f32 %v125, %v130
    %133 = vadd.xlane.f32.xlu0 %v131
    %v134 = vpop.xlane.xlu0 %133
    %135 = vadd.xlane.f32.xlu0 %v132
    %v136 = vpop.xlane.xlu0 %135
    %s137 = sld [smem:[#allocation2]]
    %v138 = vstv %s137
    %v139 = vadd.f32 %v134, %v138
    %v140 = vadd.f32 %v136, %v138
    %v141 = vlaneseq
    %v142 = vshrl.u32 %v141, 7
    %v143 = vsub.s32 1, %v142
    %v144 = vrot.slane %v126, %v143
    %v145 = vmul.f32 %v124, %v144
    %v146 = vmul.f32 %v125, %v144
    %147 = vadd.xlane.f32.xlu0 %v145
    %v148 = vpop.xlane.xlu0 %147
    %149 = vadd.xlane.f32.xlu0 %v146
    %v150 = vpop.xlane.xlu0 %149
    %s151 = sld [smem:[#allocation2 + $0x1]]
    %v152 = vstv %s151
    %v153 = vadd.f32 %v148, %v152
    %v154 = vadd.f32 %v150, %v152
    %v155 = vxor.u32 %v139, 2147483648
    %v156 = vxor.u32 %v140, 2147483648
    %v157 = vmul.f32 %v155, 1.442695
    %v158 = vpow.pop %v157
    %v159 = vmul.f32 %v156, 1.442695
    %v160 = vpow.pop %v159
    %v161 = vadd.f32 %v158, 1.0
    %v162 = vadd.f32 %v160, 1.0
    %v163 = vrcp.pop %v161
    %v164 = vmul.f32 1.0, %v163
    %v165 = vrcp.pop %v162
    %v166 = vmul.f32 1.0, %v165
    %v167 = vxor.u32 %v153, 2147483648
    %v168 = vxor.u32 %v154, 2147483648
    %v169 = vmul.f32 %v167, 1.442695
    %v170 = vpow.pop %v169
    %v171 = vmul.f32 %v168, 1.442695
    %v172 = vpow.pop %v171
    %v173 = vadd.f32 %v170, 1.0
    %v174 = vadd.f32 %v172, 1.0
    %v175 = vrcp.pop %v173
    %v176 = vmul.f32 1.0, %v175
    %v177 = vrcp.pop %v174
    %v178 = vmul.f32 1.0, %v177
    %v179 = vlaneseq
    %v180 = vand.u32 %v179, 127
    %vm181 = vcmp.eq.s32.totalorder %v180, 0
    %v182 = vsel %vm181, %v164, %v176
    %v183 = vsel %vm181, %v166, %v178
    %vm184 = vcmask 15360
    %185 = vst.msk [vmem:[%s9] sm:$0xff] %vm184, %v182
    %186 = vst.msk [vmem:[%s9 + $0x8] sm:$0xff] %vm184, %v183
    %v187 = vld [vmem:[%s5] sm:$0x3]
    %v188 = vlaneseq
    %v189 = vshrl.u32 %v188, 7
    %v190 = vsub.s32 0, %v189
    %v191 = vrot.slane %v187, %v190
    %v192 = vmul.f32 %v164, %v191
    %v193 = vmul.f32 %v166, %v191
    %v194 = vlaneseq
    %v195 = vshrl.u32 %v194, 7
    %v196 = vsub.s32 1, %v195
    %v197 = vrot.slane %v187, %v196
    %v198 = vmul.f32 %v176, %v197
    %v199 = vmul.f32 %v178, %v197
    %v200 = vadd.f32 %v192, %v198
    %v201 = vadd.f32 %v193, %v199
    %v202 = vld [vmem:[%s6] sm:$0x1]
    %v204 = vlaneseq
    %v205 = vshrl.u32 %v204, 7
    %v206 = vsub.s32 0, %v205
    %v207 = vrot.slane %v202, %v206
    %v209 = vadd.f32 %v200, %v207
    %v210 = vadd.f32 %v201, %v207
    %v211 = vmax.f32 %v209, 0.0
    %v212 = vmax.f32 %v210, 0.0
    %v213 = vpack.c.bf16 %v212, %v211
    %v214 = vld [vmem:[%s7] sm:$0xf]
    %v215 = vld [vmem:[%s7 + $0x4] sm:$0xf]
    %v216 = vld [vmem:[%s7 + $0x8] sm:$0xf]
    %v217 = vld [vmem:[%s7 + $0xc] sm:$0xf]
    %v218 = vld [vmem:[%s7 + $0x10] sm:$0xf]
    %v219 = vld [vmem:[%s7 + $0x14] sm:$0xf]
    %v220 = vld [vmem:[%s7 + $0x18] sm:$0xf]
    %v221 = vld [vmem:[%s7 + $0x1c] sm:$0xf]
    %v222 = vld [vmem:[%s7 + $0x20] sm:$0xf]
    %v223 = vld [vmem:[%s7 + $0x24] sm:$0xf]
    %v224 = vld [vmem:[%s7 + $0x28] sm:$0xf]
    %v225 = vld [vmem:[%s7 + $0x2c] sm:$0xf]
    %v226 = vld [vmem:[%s7 + $0x30] sm:$0xf]
    %v227 = vld [vmem:[%s7 + $0x34] sm:$0xf]
    %v228 = vld [vmem:[%s7 + $0x38] sm:$0xf]
    %v229 = vld [vmem:[%s7 + $0x3c] sm:$0xf]
    %v230 = vld [vmem:[%s8] sm:$0x1]
    %v232 = vlaneseq
    %v233 = vshrl.u32 %v232, 7
    %v234 = vsub.s32 0, %v233
    %v235 = vrot.slane %v230, %v234
    %v253 = vunpack.c.l.b16 %v214
    %v254 = vunpack.c.l.b16 %v215
    %v255 = vunpack.c.l.b16 %v216
    %v256 = vunpack.c.l.b16 %v217
    %v257 = vunpack.c.l.b16 %v218
    %v258 = vunpack.c.l.b16 %v219
    %v259 = vunpack.c.l.b16 %v220
    %v260 = vunpack.c.l.b16 %v221
    %v261 = vunpack.c.l.b16 %v222
    %v262 = vunpack.c.l.b16 %v223
    %v263 = vunpack.c.l.b16 %v224
    %v264 = vunpack.c.l.b16 %v225
    %v265 = vunpack.c.l.b16 %v226
    %v266 = vunpack.c.l.b16 %v227
    %v267 = vunpack.c.l.b16 %v228
    %v268 = vunpack.c.l.b16 %v229
    %v269 = vpack.c.b16 %v254, %v253
    %v270 = vpack.c.b16 %v256, %v255
    %v271 = vpack.c.b16 %v258, %v257
    %v272 = vpack.c.b16 %v260, %v259
    %v273 = vpack.c.b16 %v262, %v261
    %v274 = vpack.c.b16 %v264, %v263
    %v275 = vpack.c.b16 %v266, %v265
    %v276 = vpack.c.b16 %v268, %v267
    %285 = vmatprep.subr.bf16.mxu0 0
    %286 = vmatpush1.bf16.msra.mxu0 %v276
    %287 = vmatprep.subr.bf16.mxu0 0
    %288 = vmatpush1.bf16.msra.mxu0 %v275
    %289 = vmatprep.subr.bf16.mxu0 0
    %290 = vmatpush1.bf16.msra.mxu0 %v274
    %291 = vmatprep.subr.bf16.mxu0 0
    %292 = vmatpush1.bf16.msra.mxu0 %v273
    %293 = vmatprep.subr.bf16.mxu0 0
    %294 = vmatpush1.bf16.msra.mxu0 %v272
    %295 = vmatprep.subr.bf16.mxu0 0
    %296 = vmatpush1.bf16.msra.mxu0 %v271
    %297 = vmatprep.subr.bf16.mxu0 0
    %298 = vmatpush1.bf16.msra.mxu0 %v270
    %299 = vmatprep.subr.bf16.mxu0 0
    %300 = vmatpush1.bf16.msra.mxu0 %v269
    %301 = vmatprep.subr.bf16.mxu0 0
    %302 = vmatpush2.bf16.msra.mxu0 0
    %303 = vmatprep.subr.bf16.mxu0 0
    %304 = vmatpush2.bf16.msra.mxu0 0
    %305 = vmatprep.subr.bf16.mxu0 0
    %306 = vmatpush2.bf16.msra.mxu0 0
    %307 = vmatprep.subr.bf16.mxu0 0
    %308 = vmatpush2.bf16.msra.mxu0 0
    %309 = vmatprep.subr.bf16.mxu0 0
    %310 = vmatpush2.bf16.msra.mxu0 0
    %311 = vmatprep.subr.bf16.mxu0 0
    %312 = vmatpush2.bf16.msra.mxu0 0
    %313 = vmatprep.subr.bf16.mxu0 0
    %314 = vmatpush2.bf16.msra.mxu0 0
    %315 = vmatprep.subr.bf16.mxu0 0
    %316 = vmatpush2.bf16.msra.mxu0 0
    %317 = vmatprep.mubr.bf16.mxu0 0
    %318 = vmatmul.mubr.bf16.gmra.mxu0 %v213
    %v319 = vpop.f32.mrf.mxu0
    %v320 = vadd.f32 %v235, %v319
    %v321 = vpop.f32.mrf.mxu0
    %v322 = vpop.f32.mrf.mxu0
    %v323 = vadd.f32 %v235, %v322
    %v324 = vpop.f32.mrf.mxu0
    %325 = vdwg.mxu0
    %326 = vst.msk [vmem:[#allocation5] sm:$0xff] %vm79, %v320
    %327 = vst.msk [vmem:[#allocation5 + $0x8] sm:$0xff] %vm79, %v323
    // Predicated region
    $region42: #{tpu_custom_call.1} parent=1 // pred_check
      _
    $region43: #{tpu_custom_call.1} parent=1 // pred_check_branch
      %329 = sbr.rel (0) target = $region45
    $region44: #{tpu_custom_call.1} parent=1 // pred_region
      _
    $region45: #{tpu_custom_call.1} parent=1 // pred_fallthru
      _
    // Predicated region
    $region46: #{tpu_custom_call.1} parent=1 // pred_check
      _
    $region47: #{tpu_custom_call.1} parent=1 // pred_check_branch
      %331 = sbr.rel (0) target = $region49
    $region48: #{tpu_custom_call.1} parent=1 // pred_region
      %s333 = ssub.s32 256, 256
      %334 = vsyncadd [#allocation3], %s333
      %s335 = sshll.u32 [#allocation5], 4
      %s336 = int_to_ptr.vmem [resolvable:$true] %s335
      %341 = dma.vmem_to_hbm [thread:$0]  %s336, 256, %s10, [#allocation3], 128, 128, 8
    $region49: #{tpu_custom_call.1} parent=1 // pred_fallthru
      _
    // Predicated region
    $region50: #{tpu_custom_call.1} parent=1 // pred_check
      _
    $region51: #{tpu_custom_call.1} parent=1 // pred_check_branch
      %343 = sbr.rel (0) target = $region53
    $region52: #{tpu_custom_call.1} parent=1 // pred_region
      _
    $region53: #{tpu_custom_call.1} parent=1 // pred_fallthru
      _
    // Predicated region
    $region54: #{tpu_custom_call.1} parent=1 // pred_check
      _
    $region55: #{tpu_custom_call.1} parent=1 // pred_check_branch
      %345 = sbr.rel (0) target = $region57
    $region56: #{tpu_custom_call.1} parent=1 // pred_region
      %346 = dma.done [#allocation3], 256
    $region57: #{tpu_custom_call.1} parent=1 // pred_fallthru
      _
    %347 = vsyncpa [#allocation3], 1
    %348 = vsyncpa [#allocation4], 1

</llo_original>
